<compile_context>
chip_gen: v5e
topology: v5e:2x2
jax: 0.10.0
libtpu: 0.0.40
codegen_flags: <defaults>
</compile_context>

<pallas_src>
import jax
import jax.numpy as jnp
from jax.experimental import pallas as pl
from jax.experimental.pallas import tpu as pltpu


def _sigmoid(x):
    # sigmoid(x) = 0.5 * (1 + tanh(x/2)); tanh rides the EUP slot (no VALU divide).
    return 0.5 * (jnp.tanh(0.5 * x) + 1.0)


def attn_decoder_kernel(x_ref, state_ref, enc_ref, attn_bias_ref,
                        w_attn_ref, w_comb_ref, w_lstm_ref, w_out_ref,
                        biases_ref, packed_ref):
    E = x_ref.shape[1]
    H = state_ref.shape[2]
    V = w_out_ref.shape[1]
    L_i = attn_bias_ref.shape[1]

    x = x_ref[...]            # [N, E]  (dropout: eval-mode identity)
    h = state_ref[0]          # [N, H]  == hidden[-1]
    c = state_ref[1]          # [N, H]  == cell[-1]

    # attn = Linear(E+H -> L_i) on cat(x, h); split matmul avoids in-kernel concat.
    # b_attn and the padding mask are pre-folded into attn_bias (0 or -1e30).
    logits = (jnp.dot(x, w_attn_ref[:E, :], preferred_element_type=jnp.float32)
              + jnp.dot(h, w_attn_ref[E:, :], preferred_element_type=jnp.float32)
              + attn_bias_ref[...])                                # [N, L_i]

    m = jnp.max(logits, axis=-1, keepdims=True)
    e = jnp.exp(logits - m)
    attn_w = e * pl.reciprocal(jnp.sum(e, axis=-1, keepdims=True), approx=True)

    # bmm(attn_w[:, None], encoder_houts)[:, 0]: broadcast-multiply + sublane
    # reduce (L_i is small, so this beats a batched MXU matmul).
    attn_res = jnp.sum(attn_w[:, :, None] * enc_ref[...], axis=1)  # [N, H]

    # attn_combine = Linear(E+H -> H) on cat(x, attn_res); then ReLU.
    comb = (jnp.dot(x, w_comb_ref[:E, :], preferred_element_type=jnp.float32)
            + jnp.dot(attn_res, w_comb_ref[E:, :], preferred_element_type=jnp.float32)
            + biases_ref[0:1, :H])
    lstm_in = jnp.maximum(comb, 0.0)                               # [N, H]

    # Single-step LSTM (num_layers=1, seq_len=1); PyTorch gate order i, f, g, o.
    # One dot per gate against gate-major packed weights [4, 2H, H]: avoids
    # lane-slicing a [N, 4H] gates tensor into sub-128-lane windows.
    def gate_pre(k):
        wk = w_lstm_ref[k]                                         # [2H, H]
        return (jnp.dot(lstm_in, wk[:H, :], preferred_element_type=jnp.float32)
                + jnp.dot(h, wk[H:, :], preferred_element_type=jnp.float32)
                + biases_ref[2 + k:3 + k, :H])

    i_g = _sigmoid(gate_pre(0))
    f_g = _sigmoid(gate_pre(1))
    g_g = jnp.tanh(gate_pre(2))
    o_g = _sigmoid(gate_pre(3))
    c_new = f_g * c + i_g * g_g
    h_new = o_g * jnp.tanh(c_new)

    # out_fc + LogSoftmax(dim=1)
    out = (jnp.dot(h_new, w_out_ref[...], preferred_element_type=jnp.float32)
           + biases_ref[1:2, :V])                                  # [N, V]
    mo = jnp.max(out, axis=-1, keepdims=True)
    lse = jnp.log(jnp.sum(jnp.exp(out - mo), axis=-1, keepdims=True)) + mo
    logp = out - lse

    # Single lane-dense output slab (last dim is a multiple of 128):
    #   [ logp (V) | h_new (H) | c_new (H) | attn_w (L_i) | zero pad ]
    packed_ref[...] = jnp.zeros_like(packed_ref)
    packed_ref[:, 0:V] = logp
    packed_ref[:, V:V + H] = h_new
    packed_ref[:, V + H:V + 2 * H] = c_new
    packed_ref[:, V + 2 * H:V + 2 * H + L_i] = attn_w


def pack_params(params, L_i):
    """One-time parameter packing (hoisted out of the per-step hot path)."""
    H = params["w_comb"].shape[1]
    V = params["w_out"].shape[1]
    BW = max(H, V)

    # Gate-major LSTM weights: [4, 2H, H]; rows [:H] = w_ih gate k, [H:] = w_hh gate k.
    w_ih_g = params["w_ih"].reshape(H, 4, H).transpose(1, 0, 2)    # [4, H, H]
    w_hh_g = params["w_hh"].reshape(H, 4, H).transpose(1, 0, 2)    # [4, H, H]
    w_lstm = jnp.concatenate([w_ih_g, w_hh_g], axis=1)             # [4, 2H, H]

    # All small biases packed into one array (row 0: b_comb, row 1: b_out,
    # rows 2..5: the four LSTM gate biases).
    biases = jnp.zeros((6, BW), jnp.float32)
    biases = biases.at[0, :H].set(params["b_comb"][0])
    biases = biases.at[1, :V].set(params["b_out"][0])
    biases = biases.at[2:6, :H].set(params["b_lstm"].reshape(4, H))

    return {
        "embedding": params["embedding"],
        "w_attn": params["w_attn"][:, :L_i],     # slice to L_i once, not per call
        "b_attn": params["b_attn"][:, :L_i],
        "w_comb": params["w_comb"],
        "w_lstm": w_lstm,
        "w_out": params["w_out"],
        "biases": biases,
    }


def attn_decoder_forward(inp, hidden, cell, encoder_houts, ingredients,
                         packed, padding_val):
    N, L_i, H = encoder_houts.shape
    E = packed["embedding"].shape[1]
    V = packed["w_out"].shape[1]
    assert packed["w_attn"].shape[1] == L_i, "params packed for a different L_i"

    # Glue (plain XLA): embedding lookup, state stacking, additive padding mask.
    x = jnp.take(packed["embedding"], inp, axis=0)                 # [N, E]
    state = jnp.stack([hidden[-1], cell[-1]], axis=0)              # [2, N, H]
    attn_bias = packed["b_attn"] + jnp.where(
        ingredients == padding_val, jnp.float32(-1e30), jnp.float32(0.0))

    W_total = V + 2 * H + L_i
    W_pad = ((W_total + 127) // 128) * 128                         # lane-dense slab

    vmem = pl.BlockSpec(memory_space=pltpu.MemorySpace.VMEM)
    packed_out = pl.pallas_call(
        attn_decoder_kernel,
        out_shape=jax.ShapeDtypeStruct((N, W_pad), jnp.float32),
        in_specs=[vmem] * 9,
        out_specs=vmem,
    )(x, state, encoder_houts, attn_bias,
      packed["w_attn"], packed["w_comb"], packed["w_lstm"],
      packed["w_out"], packed["biases"])

    logp = packed_out[:, :V]
    h_new = packed_out[:, V:V + H]
    c_new = packed_out[:, V + H:V + 2 * H]
    attn_w = packed_out[:, V + 2 * H:V + 2 * H + L_i]
    # Match PyTorch return shapes: (out [N,V], h_final [1,N,H], c_final [1,N,H], attn_w [N,L_i])
    return logp, h_new[None], c_new[None], attn_w


def _reference_forward(inp, hidden, cell, encoder_houts, ingredients,
                       params, padding_val):
    """Pure-JAX reference mirroring the PyTorch forward (eval mode)."""
    N, L_i, H = encoder_houts.shape
    x = jnp.take(params["embedding"], inp, axis=0)
    h = hidden[-1]
    c = cell[-1]
    xh = jnp.concatenate([x, h], axis=1)
    logits = (xh @ params["w_attn"] + params["b_attn"])[:, :L_i]
    logits = jnp.where(ingredients == padding_val, -jnp.inf, logits)
    attn_w = jax.nn.softmax(logits, axis=-1)
    attn_res = jnp.einsum("nl,nlh->nh", attn_w, encoder_houts)
    comb = jnp.concatenate([x, attn_res], axis=1) @ params["w_comb"] + params["b_comb"]
    lstm_in = jax.nn.relu(comb)
    gates = lstm_in @ params["w_ih"] + h @ params["w_hh"] + params["b_lstm"]
    i_g, f_g, g_g, o_g = jnp.split(gates, 4, axis=1)
    c_new = jax.nn.sigmoid(f_g) * c + jax.nn.sigmoid(i_g) * jnp.tanh(g_g)
    h_new = jax.nn.sigmoid(o_g) * jnp.tanh(c_new)
    out = h_new @ params["w_out"] + params["b_out"]
    logp = jax.nn.log_softmax(out, axis=1)
    return logp, h_new[None], c_new[None], attn_w


if __name__ == "__main__":
    # Small shapes consistent with the module.
    N = 4            # batch
    E = 32           # embedding_size
    H = 32           # hidden_size
    V = 64           # output_size (vocab)
    L_MAX = 16       # global_max_ing_len
    L_I = 12         # padded encoder sequence length (<= L_MAX)
    PAD = 0          # padding_val

    key = jax.random.PRNGKey(0)
    ks = jax.random.split(key, 16)

    # Deterministic synthetic parameters ([in, out] layout for all Linears).
    params = {
        "embedding": jax.random.normal(ks[0], (V, E), jnp.float32) * 0.1,
        "w_attn": jax.random.normal(ks[1], (E + H, L_MAX), jnp.float32) * 0.1,
        "b_attn": jax.random.normal(ks[2], (1, L_MAX), jnp.float32) * 0.1,
        "w_comb": jax.random.normal(ks[3], (E + H, H), jnp.float32) * 0.1,
        "b_comb": jax.random.normal(ks[4], (1, H), jnp.float32) * 0.1,
        "w_ih": jax.random.normal(ks[5], (H, 4 * H), jnp.float32) * 0.1,
        "w_hh": jax.random.normal(ks[6], (H, 4 * H), jnp.float32) * 0.1,
        "b_lstm": jax.random.normal(ks[7], (1, 4 * H), jnp.float32) * 0.1,  # b_ih + b_hh
        "w_out": jax.random.normal(ks[8], (H, V), jnp.float32) * 0.1,
        "b_out": jax.random.normal(ks[9], (1, V), jnp.float32) * 0.1,
    }

    # Deterministic synthetic inputs.
    inp = jax.random.randint(ks[10], (N,), 0, V, jnp.int32)
    hidden = jax.random.normal(ks[11], (1, N, H), jnp.float32)
    cell = jax.random.normal(ks[12], (1, N, H), jnp.float32)
    encoder_houts = jax.random.normal(ks[13], (N, L_I, H), jnp.float32)
    ingredients = jax.random.randint(ks[14], (N, L_I), 1, 50, jnp.int32)
    # Introduce some padding positions (but never a fully-padded row).
    ingredients = ingredients.at[0, 9:].set(PAD)
    ingredients = ingredients.at[1, 6:].set(PAD)

    # One-time packing (weights / biases stay in this layout across decode steps).
    packed = pack_params(params, L_I)

    out = attn_decoder_forward(inp, hidden, cell, encoder_houts, ingredients,
                               packed, PAD)
    out = jax.block_until_ready(out)

    ref = _reference_forward(inp, hidden, cell, encoder_houts, ingredients,
                             params, PAD)
    for got, want in zip(out, ref):
        assert got.shape == want.shape, (got.shape, want.shape)
        # Tolerance accounts for the EUP approx reciprocal in the attention softmax.
        assert jnp.allclose(got, want, atol=2e-3, rtol=2e-3), "mismatch vs reference"

    # TODO(synk): nn.Dropout(p=0.1) is stochastic; implemented as eval-mode identity.
    print("KERNEL_OK")
</pallas_src>

<mosaic_0001>
module attributes {stable_mosaic.version = 11 : i64} {
  func.func @attn_decoder_kernel(%arg0: memref<4x32xf32, #tpu.memory_space<vmem>>, %arg1: memref<2x4x32xf32, #tpu.memory_space<vmem>>, %arg2: memref<4x12x32xf32, #tpu.memory_space<vmem>>, %arg3: memref<4x12xf32, #tpu.memory_space<vmem>>, %arg4: memref<64x12xf32, #tpu.memory_space<vmem>>, %arg5: memref<64x32xf32, #tpu.memory_space<vmem>>, %arg6: memref<4x64x32xf32, #tpu.memory_space<vmem>>, %arg7: memref<32x64xf32, #tpu.memory_space<vmem>>, %arg8: memref<6x64xf32, #tpu.memory_space<vmem>>, %arg9: memref<4x256xf32, #tpu.memory_space<vmem>>) attributes {dimension_semantics = [], scalar_prefetch = 0 : i64, scratch_operands = 0 : i64, tpu.core_type = #tpu.core_type<tc>} {
    %c0 = arith.constant 0 : index
    %c0_0 = arith.constant 0 : index
    %0 = vector.load %arg0[%c0, %c0_0] : memref<4x32xf32, #tpu.memory_space<vmem>>, vector<4x32xf32>
    %c0_1 = arith.constant 0 : index
    %c0_2 = arith.constant 0 : index
    %c0_3 = arith.constant 0 : index
    %1 = vector.load %arg1[%c0_1, %c0_2, %c0_3] : memref<2x4x32xf32, #tpu.memory_space<vmem>>, vector<1x4x32xf32>
    %2 = vector.shape_cast %1 : vector<1x4x32xf32> to vector<4x32xf32>
    %c1 = arith.constant 1 : index
    %c0_4 = arith.constant 0 : index
    %c0_5 = arith.constant 0 : index
    %3 = vector.load %arg1[%c1, %c0_4, %c0_5] : memref<2x4x32xf32, #tpu.memory_space<vmem>>, vector<1x4x32xf32>
    %4 = vector.shape_cast %3 : vector<1x4x32xf32> to vector<4x32xf32>
    %c0_6 = arith.constant 0 : index
    %c0_7 = arith.constant 0 : index
    %5 = vector.load %arg4[%c0_6, %c0_7] : memref<64x12xf32, #tpu.memory_space<vmem>>, vector<32x12xf32>
    %cst = arith.constant dense<0.000000e+00> : vector<4x12xf32>
    %6 = tpu.matmul %0, %5, %cst {dimension_numbers = #tpu.dot_dimension_numbers<[1], [0], [0], [1], [0, 0, 1, 1], [], []>} : vector<4x32xf32>, vector<32x12xf32>, vector<4x12xf32> -> vector<4x12xf32>
    %c32 = arith.constant 32 : index
    %c0_8 = arith.constant 0 : index
    %7 = vector.load %arg4[%c32, %c0_8] : memref<64x12xf32, #tpu.memory_space<vmem>>, vector<32x12xf32>
    %cst_9 = arith.constant dense<0.000000e+00> : vector<4x12xf32>
    %8 = tpu.matmul %2, %7, %cst_9 {dimension_numbers = #tpu.dot_dimension_numbers<[1], [0], [0], [1], [0, 0, 1, 1], [], []>} : vector<4x32xf32>, vector<32x12xf32>, vector<4x12xf32> -> vector<4x12xf32>
    %9 = arith.addf %6, %8 : vector<4x12xf32>
    %c0_10 = arith.constant 0 : index
    %c0_11 = arith.constant 0 : index
    %10 = vector.load %arg3[%c0_10, %c0_11] : memref<4x12xf32, #tpu.memory_space<vmem>>, vector<4x12xf32>
    %11 = arith.addf %9, %10 : vector<4x12xf32>
    %cst_12 = arith.constant dense<0xFF800000> : vector<4xf32>
    %12 = vector.multi_reduction <maximumf>, %11, %cst_12 [1] : vector<4x12xf32> to vector<4xf32>
    %13 = vector.shape_cast %12 : vector<4xf32> to vector<4x1xf32>
    %14 = vector.broadcast %13 : vector<4x1xf32> to vector<4x12xf32>
    %15 = arith.subf %11, %14 : vector<4x12xf32>
    %16 = math.exp %15 : vector<4x12xf32>
    %cst_13 = arith.constant dense<0.000000e+00> : vector<4xf32>
    %17 = vector.multi_reduction <add>, %16, %cst_13 [1] : vector<4x12xf32> to vector<4xf32>
    %18 = vector.shape_cast %17 : vector<4xf32> to vector<4x1xf32>
    %19 = tpu.reciprocal %18 {approx = true} : vector<4x1xf32> -> vector<4x1xf32>
    %20 = vector.broadcast %19 : vector<4x1xf32> to vector<4x12xf32>
    %21 = arith.mulf %16, %20 : vector<4x12xf32>
    %22 = vector.shape_cast %21 : vector<4x12xf32> to vector<4x12x1xf32>
    %c0_14 = arith.constant 0 : index
    %c0_15 = arith.constant 0 : index
    %c0_16 = arith.constant 0 : index
    %23 = vector.load %arg2[%c0_14, %c0_15, %c0_16] : memref<4x12x32xf32, #tpu.memory_space<vmem>>, vector<4x12x32xf32>
    %24 = vector.broadcast %22 : vector<4x12x1xf32> to vector<4x12x32xf32>
    %25 = arith.mulf %24, %23 : vector<4x12x32xf32>
    %cst_17 = arith.constant dense<0.000000e+00> : vector<4x32xf32>
    %26 = vector.multi_reduction <add>, %25, %cst_17 [1] : vector<4x12x32xf32> to vector<4x32xf32>
    %c0_18 = arith.constant 0 : index
    %c0_19 = arith.constant 0 : index
    %27 = vector.load %arg5[%c0_18, %c0_19] : memref<64x32xf32, #tpu.memory_space<vmem>>, vector<32x32xf32>
    %cst_20 = arith.constant dense<0.000000e+00> : vector<4x32xf32>
    %28 = tpu.matmul %0, %27, %cst_20 {dimension_numbers = #tpu.dot_dimension_numbers<[1], [0], [0], [1], [0, 0, 1, 1], [], []>} : vector<4x32xf32>, vector<32x32xf32>, vector<4x32xf32> -> vector<4x32xf32>
    %c32_21 = arith.constant 32 : index
    %c0_22 = arith.constant 0 : index
    %29 = vector.load %arg5[%c32_21, %c0_22] : memref<64x32xf32, #tpu.memory_space<vmem>>, vector<32x32xf32>
    %cst_23 = arith.constant dense<0.000000e+00> : vector<4x32xf32>
    %30 = tpu.matmul %26, %29, %cst_23 {dimension_numbers = #tpu.dot_dimension_numbers<[1], [0], [0], [1], [0, 0, 1, 1], [], []>} : vector<4x32xf32>, vector<32x32xf32>, vector<4x32xf32> -> vector<4x32xf32>
    %31 = arith.addf %28, %30 : vector<4x32xf32>
    %c0_24 = arith.constant 0 : index
    %c0_25 = arith.constant 0 : index
    %32 = vector.load %arg8[%c0_24, %c0_25] : memref<6x64xf32, #tpu.memory_space<vmem>>, vector<1x32xf32>
    %33 = vector.broadcast %32 : vector<1x32xf32> to vector<4x32xf32>
    %34 = arith.addf %31, %33 : vector<4x32xf32>
    %cst_26 = arith.constant 0.000000e+00 : f32
    %35 = vector.broadcast %cst_26 : f32 to vector<4x32xf32>
    %36 = arith.maximumf %34, %35 : vector<4x32xf32>
    %c0_27 = arith.constant 0 : index
    %c0_28 = arith.constant 0 : index
    %c0_29 = arith.constant 0 : index
    %37 = vector.load %arg6[%c0_27, %c0_28, %c0_29] : memref<4x64x32xf32, #tpu.memory_space<vmem>>, vector<1x64x32xf32>
    %38 = vector.shape_cast %37 : vector<1x64x32xf32> to vector<64x32xf32>
    %39 = vector.extract_strided_slice %38 {offsets = [0, 0], sizes = [32, 32], strides = [1, 1]} : vector<64x32xf32> to vector<32x32xf32>
    %cst_30 = arith.constant dense<0.000000e+00> : vector<4x32xf32>
    %40 = tpu.matmul %36, %39, %cst_30 {dimension_numbers = #tpu.dot_dimension_numbers<[1], [0], [0], [1], [0, 0, 1, 1], [], []>} : vector<4x32xf32>, vector<32x32xf32>, vector<4x32xf32> -> vector<4x32xf32>
    %41 = vector.extract_strided_slice %38 {offsets = [32, 0], sizes = [32, 32], strides = [1, 1]} : vector<64x32xf32> to vector<32x32xf32>
    %cst_31 = arith.constant dense<0.000000e+00> : vector<4x32xf32>
    %42 = tpu.matmul %2, %41, %cst_31 {dimension_numbers = #tpu.dot_dimension_numbers<[1], [0], [0], [1], [0, 0, 1, 1], [], []>} : vector<4x32xf32>, vector<32x32xf32>, vector<4x32xf32> -> vector<4x32xf32>
    %43 = arith.addf %40, %42 : vector<4x32xf32>
    %c2 = arith.constant 2 : index
    %c0_32 = arith.constant 0 : index
    %44 = vector.load %arg8[%c2, %c0_32] : memref<6x64xf32, #tpu.memory_space<vmem>>, vector<1x32xf32>
    %45 = vector.broadcast %44 : vector<1x32xf32> to vector<4x32xf32>
    %46 = arith.addf %43, %45 : vector<4x32xf32>
    %cst_33 = arith.constant 5.000000e-01 : f32
    %47 = vector.broadcast %cst_33 : f32 to vector<4x32xf32>
    %48 = arith.mulf %47, %46 : vector<4x32xf32>
    %49 = math.tanh %48 : vector<4x32xf32>
    %cst_34 = arith.constant 1.000000e+00 : f32
    %50 = vector.broadcast %cst_34 : f32 to vector<4x32xf32>
    %51 = arith.addf %49, %50 : vector<4x32xf32>
    %cst_35 = arith.constant 5.000000e-01 : f32
    %52 = vector.broadcast %cst_35 : f32 to vector<4x32xf32>
    %53 = arith.mulf %52, %51 : vector<4x32xf32>
    %c1_36 = arith.constant 1 : index
    %c0_37 = arith.constant 0 : index
    %c0_38 = arith.constant 0 : index
    %54 = vector.load %arg6[%c1_36, %c0_37, %c0_38] : memref<4x64x32xf32, #tpu.memory_space<vmem>>, vector<1x64x32xf32>
    %55 = vector.shape_cast %54 : vector<1x64x32xf32> to vector<64x32xf32>
    %56 = vector.extract_strided_slice %55 {offsets = [0, 0], sizes = [32, 32], strides = [1, 1]} : vector<64x32xf32> to vector<32x32xf32>
    %cst_39 = arith.constant dense<0.000000e+00> : vector<4x32xf32>
    %57 = tpu.matmul %36, %56, %cst_39 {dimension_numbers = #tpu.dot_dimension_numbers<[1], [0], [0], [1], [0, 0, 1, 1], [], []>} : vector<4x32xf32>, vector<32x32xf32>, vector<4x32xf32> -> vector<4x32xf32>
    %58 = vector.extract_strided_slice %55 {offsets = [32, 0], sizes = [32, 32], strides = [1, 1]} : vector<64x32xf32> to vector<32x32xf32>
    %cst_40 = arith.constant dense<0.000000e+00> : vector<4x32xf32>
    %59 = tpu.matmul %2, %58, %cst_40 {dimension_numbers = #tpu.dot_dimension_numbers<[1], [0], [0], [1], [0, 0, 1, 1], [], []>} : vector<4x32xf32>, vector<32x32xf32>, vector<4x32xf32> -> vector<4x32xf32>
    %60 = arith.addf %57, %59 : vector<4x32xf32>
    %c3 = arith.constant 3 : index
    %c0_41 = arith.constant 0 : index
    %61 = vector.load %arg8[%c3, %c0_41] : memref<6x64xf32, #tpu.memory_space<vmem>>, vector<1x32xf32>
    %62 = vector.broadcast %61 : vector<1x32xf32> to vector<4x32xf32>
    %63 = arith.addf %60, %62 : vector<4x32xf32>
    %cst_42 = arith.constant 5.000000e-01 : f32
    %64 = vector.broadcast %cst_42 : f32 to vector<4x32xf32>
    %65 = arith.mulf %64, %63 : vector<4x32xf32>
    %66 = math.tanh %65 : vector<4x32xf32>
    %cst_43 = arith.constant 1.000000e+00 : f32
    %67 = vector.broadcast %cst_43 : f32 to vector<4x32xf32>
    %68 = arith.addf %66, %67 : vector<4x32xf32>
    %cst_44 = arith.constant 5.000000e-01 : f32
    %69 = vector.broadcast %cst_44 : f32 to vector<4x32xf32>
    %70 = arith.mulf %69, %68 : vector<4x32xf32>
    %c2_45 = arith.constant 2 : index
    %c0_46 = arith.constant 0 : index
    %c0_47 = arith.constant 0 : index
    %71 = vector.load %arg6[%c2_45, %c0_46, %c0_47] : memref<4x64x32xf32, #tpu.memory_space<vmem>>, vector<1x64x32xf32>
    %72 = vector.shape_cast %71 : vector<1x64x32xf32> to vector<64x32xf32>
    %73 = vector.extract_strided_slice %72 {offsets = [0, 0], sizes = [32, 32], strides = [1, 1]} : vector<64x32xf32> to vector<32x32xf32>
    %cst_48 = arith.constant dense<0.000000e+00> : vector<4x32xf32>
    %74 = tpu.matmul %36, %73, %cst_48 {dimension_numbers = #tpu.dot_dimension_numbers<[1], [0], [0], [1], [0, 0, 1, 1], [], []>} : vector<4x32xf32>, vector<32x32xf32>, vector<4x32xf32> -> vector<4x32xf32>
    %75 = vector.extract_strided_slice %72 {offsets = [32, 0], sizes = [32, 32], strides = [1, 1]} : vector<64x32xf32> to vector<32x32xf32>
    %cst_49 = arith.constant dense<0.000000e+00> : vector<4x32xf32>
    %76 = tpu.matmul %2, %75, %cst_49 {dimension_numbers = #tpu.dot_dimension_numbers<[1], [0], [0], [1], [0, 0, 1, 1], [], []>} : vector<4x32xf32>, vector<32x32xf32>, vector<4x32xf32> -> vector<4x32xf32>
    %77 = arith.addf %74, %76 : vector<4x32xf32>
    %c4 = arith.constant 4 : index
    %c0_50 = arith.constant 0 : index
    %78 = vector.load %arg8[%c4, %c0_50] : memref<6x64xf32, #tpu.memory_space<vmem>>, vector<1x32xf32>
    %79 = vector.broadcast %78 : vector<1x32xf32> to vector<4x32xf32>
    %80 = arith.addf %77, %79 : vector<4x32xf32>
    %81 = math.tanh %80 : vector<4x32xf32>
    %c3_51 = arith.constant 3 : index
    %c0_52 = arith.constant 0 : index
    %c0_53 = arith.constant 0 : index
    %82 = vector.load %arg6[%c3_51, %c0_52, %c0_53] : memref<4x64x32xf32, #tpu.memory_space<vmem>>, vector<1x64x32xf32>
    %83 = vector.shape_cast %82 : vector<1x64x32xf32> to vector<64x32xf32>
    %84 = vector.extract_strided_slice %83 {offsets = [0, 0], sizes = [32, 32], strides = [1, 1]} : vector<64x32xf32> to vector<32x32xf32>
    %cst_54 = arith.constant dense<0.000000e+00> : vector<4x32xf32>
    %85 = tpu.matmul %36, %84, %cst_54 {dimension_numbers = #tpu.dot_dimension_numbers<[1], [0], [0], [1], [0, 0, 1, 1], [], []>} : vector<4x32xf32>, vector<32x32xf32>, vector<4x32xf32> -> vector<4x32xf32>
    %86 = vector.extract_strided_slice %83 {offsets = [32, 0], sizes = [32, 32], strides = [1, 1]} : vector<64x32xf32> to vector<32x32xf32>
    %cst_55 = arith.constant dense<0.000000e+00> : vector<4x32xf32>
    %87 = tpu.matmul %2, %86, %cst_55 {dimension_numbers = #tpu.dot_dimension_numbers<[1], [0], [0], [1], [0, 0, 1, 1], [], []>} : vector<4x32xf32>, vector<32x32xf32>, vector<4x32xf32> -> vector<4x32xf32>
    %88 = arith.addf %85, %87 : vector<4x32xf32>
    %c5 = arith.constant 5 : index
    %c0_56 = arith.constant 0 : index
    %89 = vector.load %arg8[%c5, %c0_56] : memref<6x64xf32, #tpu.memory_space<vmem>>, vector<1x32xf32>
    %90 = vector.broadcast %89 : vector<1x32xf32> to vector<4x32xf32>
    %91 = arith.addf %88, %90 : vector<4x32xf32>
    %cst_57 = arith.constant 5.000000e-01 : f32
    %92 = vector.broadcast %cst_57 : f32 to vector<4x32xf32>
    %93 = arith.mulf %92, %91 : vector<4x32xf32>
    %94 = math.tanh %93 : vector<4x32xf32>
    %cst_58 = arith.constant 1.000000e+00 : f32
    %95 = vector.broadcast %cst_58 : f32 to vector<4x32xf32>
    %96 = arith.addf %94, %95 : vector<4x32xf32>
    %cst_59 = arith.constant 5.000000e-01 : f32
    %97 = vector.broadcast %cst_59 : f32 to vector<4x32xf32>
    %98 = arith.mulf %97, %96 : vector<4x32xf32>
    %99 = arith.mulf %70, %4 : vector<4x32xf32>
    %100 = arith.mulf %53, %81 : vector<4x32xf32>
    %101 = arith.addf %99, %100 : vector<4x32xf32>
    %102 = math.tanh %101 : vector<4x32xf32>
    %103 = arith.mulf %98, %102 : vector<4x32xf32>
    %c0_60 = arith.constant 0 : index
    %c0_61 = arith.constant 0 : index
    %104 = vector.load %arg7[%c0_60, %c0_61] : memref<32x64xf32, #tpu.memory_space<vmem>>, vector<32x64xf32>
    %cst_62 = arith.constant dense<0.000000e+00> : vector<4x64xf32>
    %105 = tpu.matmul %103, %104, %cst_62 {dimension_numbers = #tpu.dot_dimension_numbers<[1], [0], [0], [1], [0, 0, 1, 1], [], []>} : vector<4x32xf32>, vector<32x64xf32>, vector<4x64xf32> -> vector<4x64xf32>
    %c1_63 = arith.constant 1 : index
    %c0_64 = arith.constant 0 : index
    %106 = vector.load %arg8[%c1_63, %c0_64] : memref<6x64xf32, #tpu.memory_space<vmem>>, vector<1x64xf32>
    %107 = vector.broadcast %106 : vector<1x64xf32> to vector<4x64xf32>
    %108 = arith.addf %105, %107 : vector<4x64xf32>
    %cst_65 = arith.constant dense<0xFF800000> : vector<4xf32>
    %109 = vector.multi_reduction <maximumf>, %108, %cst_65 [1] : vector<4x64xf32> to vector<4xf32>
    %110 = vector.shape_cast %109 : vector<4xf32> to vector<4x1xf32>
    %111 = vector.broadcast %110 : vector<4x1xf32> to vector<4x64xf32>
    %112 = arith.subf %108, %111 : vector<4x64xf32>
    %113 = math.exp %112 : vector<4x64xf32>
    %cst_66 = arith.constant dense<0.000000e+00> : vector<4xf32>
    %114 = vector.multi_reduction <add>, %113, %cst_66 [1] : vector<4x64xf32> to vector<4xf32>
    %115 = vector.shape_cast %114 : vector<4xf32> to vector<4x1xf32>
    %116 = math.log %115 : vector<4x1xf32>
    %117 = arith.addf %116, %110 : vector<4x1xf32>
    %118 = vector.broadcast %117 : vector<4x1xf32> to vector<4x64xf32>
    %119 = arith.subf %108, %118 : vector<4x64xf32>
    %cst_67 = arith.constant 0.000000e+00 : f32
    %120 = vector.broadcast %cst_67 : f32 to vector<4x256xf32>
    %c0_68 = arith.constant 0 : index
    %c0_69 = arith.constant 0 : index
    %121 = vector.load %arg9[%c0_68, %c0_69] : memref<4x256xf32, #tpu.memory_space<vmem>>, vector<4x256xf32>
    tpu.vector_store %arg9[%c0_68, %c0_69], %120 {strides = array<i32>} : memref<4x256xf32, #tpu.memory_space<vmem>>, vector<4x256xf32>,
    %c0_70 = arith.constant 0 : index
    %c0_71 = arith.constant 0 : index
    %122 = vector.load %arg9[%c0_70, %c0_71] : memref<4x256xf32, #tpu.memory_space<vmem>>, vector<4x64xf32>
    tpu.vector_store %arg9[%c0_70, %c0_71], %119 {strides = array<i32>} : memref<4x256xf32, #tpu.memory_space<vmem>>, vector<4x64xf32>,
    %c0_72 = arith.constant 0 : index
    %c64 = arith.constant 64 : index
    %123 = vector.load %arg9[%c0_72, %c64] : memref<4x256xf32, #tpu.memory_space<vmem>>, vector<4x32xf32>
    tpu.vector_store %arg9[%c0_72, %c64], %103 {strides = array<i32>} : memref<4x256xf32, #tpu.memory_space<vmem>>, vector<4x32xf32>,
    %c0_73 = arith.constant 0 : index
    %c96 = arith.constant 96 : index
    %124 = vector.load %arg9[%c0_73, %c96] : memref<4x256xf32, #tpu.memory_space<vmem>>, vector<4x32xf32>
    tpu.vector_store %arg9[%c0_73, %c96], %101 {strides = array<i32>} : memref<4x256xf32, #tpu.memory_space<vmem>>, vector<4x32xf32>,
    %c0_74 = arith.constant 0 : index
    %c128 = arith.constant 128 : index
    %125 = vector.load %arg9[%c0_74, %c128] : memref<4x256xf32, #tpu.memory_space<vmem>>, vector<4x12xf32>
    tpu.vector_store %arg9[%c0_74, %c128], %21 {strides = array<i32>} : memref<4x256xf32, #tpu.memory_space<vmem>>, vector<4x12xf32>,
    return
  }
}

</mosaic_0001>

<llo_original>
// kernel: tpu_custom_call.1
$region0: #{tpu_custom_call.1}
  #allocation0 [shape = 'u32[]', space=smem, size = 0x4, offset = 0x4, fixed_abs, tag = 'smem constant byte address 0x4 - core index']
  #allocation1 [shape = 'u32[72,128]{1,0:T(1,128)}', space=vmem, size = 0x9000, scoped, tag = 'internal scratch']
  %s0 = inlined_call_operand.vmem [shape: f32[4,32], index: 0, kind: input, shape index: {}]
  %s1 = inlined_call_operand.vmem [shape: f32[2,4,32], index: 1, kind: input, shape index: {}]
  %s2 = inlined_call_operand.vmem [shape: f32[4,12,32], index: 2, kind: input, shape index: {}]
  %s3 = inlined_call_operand.vmem [shape: f32[4,12], index: 3, kind: input, shape index: {}]
  %s4 = inlined_call_operand.vmem [shape: f32[64,12], index: 4, kind: input, shape index: {}]
  %s5 = inlined_call_operand.vmem [shape: f32[64,32], index: 5, kind: input, shape index: {}]
  %s6 = inlined_call_operand.vmem [shape: f32[4,64,32], index: 6, kind: input, shape index: {}]
  %s7 = inlined_call_operand.vmem [shape: f32[32,64], index: 7, kind: input, shape index: {}]
  %s8 = inlined_call_operand.vmem [shape: f32[6,64], index: 8, kind: input, shape index: {}]
  %s9 = inlined_call_operand.hbm [shape: f32[4,256], index: 9, kind: output, shape index: {}]
  %s10 = sld [smem:[#allocation0]]
  $region46: #{tpu_custom_call.1} parent=0
    _
  %s12 = ssub.s32 1, %s10
  %s13 = scalar_select 0, %s12, %s10
  $region1: #{tpu_custom_call.1} parent=0
    #allocation2 [shape = 'u8[4096]{0}', space=vmem, size = 0x1000, scoped, tag = 'output window, operand 0, single buffered']
    #allocation3 [shape = 's32[1]{0}', space=sflag, size = 0x4, scoped, tag = 'scoped memory for tpu_custom_call.1']
    %14 = vsyncpa [#allocation3], 0
    // Predicated region
    $region2: #{tpu_custom_call.1} parent=1 // pred_check
      _
    $region3: #{tpu_custom_call.1} parent=1 // pred_check_branch
      %16 = sbr.rel (0) target = $region5
    $region4: #{tpu_custom_call.1} parent=1 // pred_region
      _
    $region5: #{tpu_custom_call.1} parent=1 // pred_fallthru
      _
    // Predicated region
    $region6: #{tpu_custom_call.1} parent=1 // pred_check
      _
    $region7: #{tpu_custom_call.1} parent=1 // pred_check_branch
      %18 = sbr.rel (0) target = $region9
    $region8: #{tpu_custom_call.1} parent=1 // pred_region
      _
    $region9: #{tpu_custom_call.1} parent=1 // pred_fallthru
      _
    // Predicated region
    $region10: #{tpu_custom_call.1} parent=1 // pred_check
      _
    $region11: #{tpu_custom_call.1} parent=1 // pred_check_branch
      %20 = sbr.rel (0) target = $region13
    $region12: #{tpu_custom_call.1} parent=1 // pred_region
      _
    $region13: #{tpu_custom_call.1} parent=1 // pred_fallthru
      _
    // Predicated region
    $region14: #{tpu_custom_call.1} parent=1 // pred_check
      _
    $region15: #{tpu_custom_call.1} parent=1 // pred_check_branch
      %22 = sbr.rel (0) target = $region17
    $region16: #{tpu_custom_call.1} parent=1 // pred_region
      _
    $region17: #{tpu_custom_call.1} parent=1 // pred_fallthru
      _
    // Predicated region
    $region18: #{tpu_custom_call.1} parent=1 // pred_check
      _
    $region19: #{tpu_custom_call.1} parent=1 // pred_check_branch
      %24 = sbr.rel (0) target = $region21
    $region20: #{tpu_custom_call.1} parent=1 // pred_region
      _
    $region21: #{tpu_custom_call.1} parent=1 // pred_fallthru
      _
    // Predicated region
    $region22: #{tpu_custom_call.1} parent=1 // pred_check
      _
    $region23: #{tpu_custom_call.1} parent=1 // pred_check_branch
      %26 = sbr.rel (0) target = $region25
    $region24: #{tpu_custom_call.1} parent=1 // pred_region
      _
    $region25: #{tpu_custom_call.1} parent=1 // pred_fallthru
      _
    // Predicated region
    $region26: #{tpu_custom_call.1} parent=1 // pred_check
      _
    $region27: #{tpu_custom_call.1} parent=1 // pred_check_branch
      %28 = sbr.rel (0) target = $region29
    $region28: #{tpu_custom_call.1} parent=1 // pred_region
      _
    $region29: #{tpu_custom_call.1} parent=1 // pred_fallthru
      _
    // Predicated region
    $region30: #{tpu_custom_call.1} parent=1 // pred_check
      _
    $region31: #{tpu_custom_call.1} parent=1 // pred_check_branch
      %30 = sbr.rel (0) target = $region33
    $region32: #{tpu_custom_call.1} parent=1 // pred_region
      _
    $region33: #{tpu_custom_call.1} parent=1 // pred_fallthru
      _
    // Predicated region
    $region34: #{tpu_custom_call.1} parent=1 // pred_check
      _
    $region35: #{tpu_custom_call.1} parent=1 // pred_check_branch
      %32 = sbr.rel (0) target = $region37
    $region36: #{tpu_custom_call.1} parent=1 // pred_region
      _
    $region37: #{tpu_custom_call.1} parent=1 // pred_fallthru
      _
    %v33 = vld [vmem:[%s0] sm:$0xf]
    %v34 = vld [vmem:[%s1] sm:$0xf]
    %s35 = scalar_lea.vmem %s1, 4
    %v36 = vld [vmem:[%s35] sm:$0xf]
    %v37 = vld [vmem:[%s4] sm:$0xff]
    %v38 = vld [vmem:[%s4 + $0x8] sm:$0xff]
    %v39 = vld [vmem:[%s4 + $0x10] sm:$0xff]
    %v40 = vld [vmem:[%s4 + $0x18] sm:$0xff]
    %v41 = vld [vmem:[%s4 + $0x20] sm:$0xff]
    %v42 = vld [vmem:[%s4 + $0x28] sm:$0xff]
    %v43 = vld [vmem:[%s4 + $0x30] sm:$0xff]
    %v44 = vld [vmem:[%s4 + $0x38] sm:$0xff]
    %vm45 = vcmask 261120
    %v47 = vsel %vm45, %v34, 0
    %49 = vmatpush.msra.mxu0 0.0
    %50 = vmatpush.msra.mxu0 0.0
    %51 = vmatpush.msra.mxu0 0.0
    %52 = vmatpush.msra.mxu0 0.0
    %53 = vmatpush.msra.mxu0 0.0
    %54 = vmatpush.msra.mxu0 0.0
    %55 = vmatpush.msra.mxu0 0.0
    %56 = vmatpush.msra.mxu0 0.0
    %57 = vmatpush.msra.mxu0 0.0
    %58 = vmatpush.msra.mxu0 0.0
    %59 = vmatpush.msra.mxu0 0.0
    %60 = vmatpush.msra.mxu0 0.0
    %61 = vmatpush.msra.mxu0 %v44
    %62 = vmatpush.msra.mxu0 %v43
    %63 = vmatpush.msra.mxu0 %v42
    %64 = vmatpush.msra.mxu0 %v41
    %65 = vmatmul.f32.gmra.mxu0 %v47
    %v66 = vpop.f32.mrf.mxu0
    %v67 = vadd.f32 0.0, %v66
    %68 = vdwg.mxu0
    %v70 = vsel %vm45, %v33, 0
    %72 = vmatpush.msra.mxu0 0.0
    %73 = vmatpush.msra.mxu0 0.0
    %74 = vmatpush.msra.mxu0 0.0
    %75 = vmatpush.msra.mxu0 0.0
    %76 = vmatpush.msra.mxu0 0.0
    %77 = vmatpush.msra.mxu0 0.0
    %78 = vmatpush.msra.mxu0 0.0
    %79 = vmatpush.msra.mxu0 0.0
    %80 = vmatpush.msra.mxu0 0.0
    %81 = vmatpush.msra.mxu0 0.0
    %82 = vmatpush.msra.mxu0 0.0
    %83 = vmatpush.msra.mxu0 0.0
    %84 = vmatpush.msra.mxu0 %v40
    %85 = vmatpush.msra.mxu0 %v39
    %86 = vmatpush.msra.mxu0 %v38
    %87 = vmatpush.msra.mxu0 %v37
    %88 = vmatmul.f32.gmra.mxu0 %v70
    %v89 = vpop.f32.mrf.mxu0
    %v90 = vadd.f32 %v67, %v89
    %91 = vdwg.mxu0
    %v92 = vld [vmem:[%s3] sm:$0xf]
    %v93 = vadd.f32 %v90, %v92
    %vm94 = vcmask 93184
    %v95 = vsel %vm94, %v93, -inf
    %96 = vmax.xlane.f32.xlu0 %v95
    %v97 = vpop.xlane.xlu0 %96
    %v98 = vsub.f32 %v93, %v97
    %v99 = vmul.f32 %v98, 1.442695
    %v100 = vpow.pop %v99
    %v101 = vsel %vm94, %v100, 0.0
    %102 = vadd.xlane.f32.xlu0 %v101
    %v103 = vpop.xlane.xlu0 %102
    %v104 = vrcp.pop %v103
    %v105 = vmul.f32 %v100, %v104
    %v106 = vperm.slane %v105, 0
    %v107 = vlaneseq
    %v108 = vshrl.u32 %v107, 7
    %110 = vset.pattern.permute.xlu0 %v108
    %111 = vperm.xlu0 %110, %v106
    %v112 = vpop.permute.xlu0 %111
    %v113 = vlaneseq
    %v114 = vshrl.u32 %v113, 7
    %v115 = vadd.s32 %v114, 8
    %116 = vset.pattern.permute.xlu0 %v115
    %117 = vperm.xlu0 %116, %v106
    %v118 = vpop.permute.xlu0 %117
    %v119 = vperm.slane %v105, 1
    %v120 = vlaneseq
    %v121 = vshrl.u32 %v120, 7
    %123 = vset.pattern.permute.xlu0 %v121
    %124 = vperm.xlu0 %123, %v119
    %v125 = vpop.permute.xlu0 %124
    %v126 = vlaneseq
    %v127 = vshrl.u32 %v126, 7
    %v128 = vadd.s32 %v127, 8
    %129 = vset.pattern.permute.xlu0 %v128
    %130 = vperm.xlu0 %129, %v119
    %v131 = vpop.permute.xlu0 %130
    %v132 = vperm.slane %v105, 2
    %v133 = vlaneseq
    %v134 = vshrl.u32 %v133, 7
    %136 = vset.pattern.permute.xlu0 %v134
    %137 = vperm.xlu0 %136, %v132
    %v138 = vpop.permute.xlu0 %137
    %v139 = vlaneseq
    %v140 = vshrl.u32 %v139, 7
    %v141 = vadd.s32 %v140, 8
    %142 = vset.pattern.permute.xlu0 %v141
    %143 = vperm.xlu0 %142, %v132
    %v144 = vpop.permute.xlu0 %143
    %v145 = vperm.slane %v105, 3
    %v146 = vlaneseq
    %v147 = vshrl.u32 %v146, 7
    %149 = vset.pattern.permute.xlu0 %v147
    %150 = vperm.xlu0 %149, %v145
    %v151 = vpop.permute.xlu0 %150
    %v152 = vlaneseq
    %v153 = vshrl.u32 %v152, 7
    %v154 = vadd.s32 %v153, 8
    %155 = vset.pattern.permute.xlu0 %v154
    %156 = vperm.xlu0 %155, %v145
    %v157 = vpop.permute.xlu0 %156
    %v158 = vld [vmem:[%s2] sm:$0xff]
    %v159 = vld [vmem:[%s2 + $0x8] sm:$0xf]
    %v160 = vld [vmem:[%s2 + $0x10] sm:$0xff]
    %v161 = vld [vmem:[%s2 + $0x18] sm:$0xf]
    %v162 = vld [vmem:[%s2 + $0x20] sm:$0xff]
    %v163 = vld [vmem:[%s2 + $0x28] sm:$0xf]
    %v164 = vld [vmem:[%s2 + $0x30] sm:$0xff]
    %v165 = vld [vmem:[%s2 + $0x38] sm:$0xf]
    %v166 = vmul.f32 %v112, %v158
    %v167 = vmul.f32 %v118, %v159
    %v168 = vmul.f32 %v125, %v160
    %v169 = vmul.f32 %v131, %v161
    %v170 = vmul.f32 %v138, %v162
    %v171 = vmul.f32 %v144, %v163
    %v172 = vmul.f32 %v151, %v164
    %v173 = vmul.f32 %v157, %v165
    %v174 = vsel %vm45, %v166, 0.0
    %vm175 = vcmask 257024
    %v176 = vsel %vm175, %v167, 0.0
    %v177 = vadd.f32 %v174, %v176
    %v178 = vrot.slane %v177, 4
    %v179 = vadd.f32 %v177, %v178
    %v180 = vrot.slane %v179, 2
    %v181 = vadd.f32 %v179, %v180
    %v182 = vrot.slane %v181, 1
    %v183 = vadd.f32 %v181, %v182
    %v184 = vsel %vm45, %v168, 0.0
    %v185 = vsel %vm175, %v169, 0.0
    %v186 = vadd.f32 %v184, %v185
    %v187 = vrot.slane %v186, 4
    %v188 = vadd.f32 %v186, %v187
    %v189 = vrot.slane %v188, 2
    %v190 = vadd.f32 %v188, %v189
    %v191 = vrot.slane %v190, 1
    %v192 = vadd.f32 %v190, %v191
    %v193 = vsel %vm45, %v170, 0.0
    %v194 = vsel %vm175, %v171, 0.0
    %v195 = vadd.f32 %v193, %v194
    %v196 = vrot.slane %v195, 4
    %v197 = vadd.f32 %v195, %v196
    %v198 = vrot.slane %v197, 2
    %v199 = vadd.f32 %v197, %v198
    %v200 = vrot.slane %v199, 1
    %v201 = vadd.f32 %v199, %v200
    %v202 = vsel %vm45, %v172, 0.0
    %v203 = vsel %vm175, %v173, 0.0
    %v204 = vadd.f32 %v202, %v203
    %v205 = vrot.slane %v204, 4
    %v206 = vadd.f32 %v204, %v205
    %v207 = vrot.slane %v206, 2
    %v208 = vadd.f32 %v206, %v207
    %v209 = vrot.slane %v208, 1
    %v210 = vadd.f32 %v208, %v209
    %v211 = vld [vmem:[%s5] sm:$0xff]
    %v212 = vld [vmem:[%s5 + $0x8] sm:$0xff]
    %v213 = vld [vmem:[%s5 + $0x10] sm:$0xff]
    %v214 = vld [vmem:[%s5 + $0x18] sm:$0xff]
    %v215 = vld [vmem:[%s5 + $0x20] sm:$0xff]
    %v216 = vld [vmem:[%s5 + $0x28] sm:$0xff]
    %v217 = vld [vmem:[%s5 + $0x30] sm:$0xff]
    %v218 = vld [vmem:[%s5 + $0x38] sm:$0xff]
    %vm223 = vcmask 1041409
    %v224 = vsel %vm223, %v192, %v183
    %vm225 = vcmask 1042434
    %v226 = vsel %vm225, %v201, %v224
    %vm227 = vcmask 1043459
    %v228 = vsel %vm227, %v210, %v226
    %v229 = vsel %vm45, %v228, 0
    %231 = vmatpush.msra.mxu0 0.0
    %232 = vmatpush.msra.mxu0 0.0
    %233 = vmatpush.msra.mxu0 0.0
    %234 = vmatpush.msra.mxu0 0.0
    %235 = vmatpush.msra.mxu0 0.0
    %236 = vmatpush.msra.mxu0 0.0
    %237 = vmatpush.msra.mxu0 0.0
    %238 = vmatpush.msra.mxu0 0.0
    %239 = vmatpush.msra.mxu0 0.0
    %240 = vmatpush.msra.mxu0 0.0
    %241 = vmatpush.msra.mxu0 0.0
    %242 = vmatpush.msra.mxu0 0.0
    %243 = vmatpush.msra.mxu0 %v218
    %244 = vmatpush.msra.mxu0 %v217
    %245 = vmatpush.msra.mxu0 %v216
    %246 = vmatpush.msra.mxu0 %v215
    %247 = vmatmul.f32.gmra.mxu0 %v229
    %v248 = vpop.f32.mrf.mxu0
    %v249 = vadd.f32 0.0, %v248
    %250 = vdwg.mxu0
    %251 = vmatpush.msra.mxu0 0.0
    %252 = vmatpush.msra.mxu0 0.0
    %253 = vmatpush.msra.mxu0 0.0
    %254 = vmatpush.msra.mxu0 0.0
    %255 = vmatpush.msra.mxu0 0.0
    %256 = vmatpush.msra.mxu0 0.0
    %257 = vmatpush.msra.mxu0 0.0
    %258 = vmatpush.msra.mxu0 0.0
    %259 = vmatpush.msra.mxu0 0.0
    %260 = vmatpush.msra.mxu0 0.0
    %261 = vmatpush.msra.mxu0 0.0
    %262 = vmatpush.msra.mxu0 0.0
    %263 = vmatpush.msra.mxu0 %v214
    %264 = vmatpush.msra.mxu0 %v213
    %265 = vmatpush.msra.mxu0 %v212
    %266 = vmatpush.msra.mxu0 %v211
    %267 = vmatmul.f32.gmra.mxu0 %v70
    %v268 = vpop.f32.mrf.mxu0
    %v269 = vadd.f32 %v249, %v268
    %270 = vdwg.mxu0
    %v271 = vld [vmem:[%s8] sm:$0x1]
    %v272 = vperm.slane %v271, 0
    %v273 = vadd.f32 %v269, %v272
    %v274 = vmax.f32 %v273, 0.0
    %v275 = vld [vmem:[%s6] sm:$0xff]
    %v276 = vld [vmem:[%s6 + $0x8] sm:$0xff]
    %v277 = vld [vmem:[%s6 + $0x10] sm:$0xff]
    %v278 = vld [vmem:[%s6 + $0x18] sm:$0xff]
    %v279 = vld [vmem:[%s6 + $0x20] sm:$0xff]
    %v280 = vld [vmem:[%s6 + $0x28] sm:$0xff]
    %v281 = vld [vmem:[%s6 + $0x30] sm:$0xff]
    %v282 = vld [vmem:[%s6 + $0x38] sm:$0xff]
    %283 = vmatpush.msra.mxu0 0.0
    %284 = vmatpush.msra.mxu0 0.0
    %285 = vmatpush.msra.mxu0 0.0
    %286 = vmatpush.msra.mxu0 0.0
    %287 = vmatpush.msra.mxu0 0.0
    %288 = vmatpush.msra.mxu0 0.0
    %289 = vmatpush.msra.mxu0 0.0
    %290 = vmatpush.msra.mxu0 0.0
    %291 = vmatpush.msra.mxu0 0.0
    %292 = vmatpush.msra.mxu0 0.0
    %293 = vmatpush.msra.mxu0 0.0
    %294 = vmatpush.msra.mxu0 0.0
    %295 = vmatpush.msra.mxu0 %v282
    %296 = vmatpush.msra.mxu0 %v281
    %297 = vmatpush.msra.mxu0 %v280
    %298 = vmatpush.msra.mxu0 %v279
    %299 = vmatmul.f32.gmra.mxu0 %v47
    %v300 = vpop.f32.mrf.mxu0
    %v301 = vadd.f32 0.0, %v300
    %302 = vdwg.mxu0
    %v304 = vsel %vm45, %v274, 0
    %306 = vmatpush.msra.mxu0 0.0
    %307 = vmatpush.msra.mxu0 0.0
    %308 = vmatpush.msra.mxu0 0.0
    %309 = vmatpush.msra.mxu0 0.0
    %310 = vmatpush.msra.mxu0 0.0
    %311 = vmatpush.msra.mxu0 0.0
    %312 = vmatpush.msra.mxu0 0.0
    %313 = vmatpush.msra.mxu0 0.0
    %314 = vmatpush.msra.mxu0 0.0
    %315 = vmatpush.msra.mxu0 0.0
    %316 = vmatpush.msra.mxu0 0.0
    %317 = vmatpush.msra.mxu0 0.0
    %318 = vmatpush.msra.mxu0 %v278
    %319 = vmatpush.msra.mxu0 %v277
    %320 = vmatpush.msra.mxu0 %v276
    %321 = vmatpush.msra.mxu0 %v275
    %322 = vmatmul.f32.gmra.mxu0 %v304
    %v323 = vpop.f32.mrf.mxu0
    %v324 = vadd.f32 %v301, %v323
    %325 = vdwg.mxu0
    %v326 = vld [vmem:[%s8 + $0x2] sm:$0x1]
    %v327 = vperm.slane %v326, 0
    %v328 = vadd.f32 %v324, %v327
    %v329 = vmul.f32 %v328, 0.5
    %v330 = vtanh.pop %v329
    %v331 = vadd.f32 %v330, 1.0
    %v332 = vmul.f32 %v331, 0.5
    %s333 = scalar_lea.vmem %s6, 64
    %v334 = vld [vmem:[%s333] sm:$0xff]
    %v335 = vld [vmem:[%s333 + $0x8] sm:$0xff]
    %v336 = vld [vmem:[%s333 + $0x10] sm:$0xff]
    %v337 = vld [vmem:[%s333 + $0x18] sm:$0xff]
    %v338 = vld [vmem:[%s333 + $0x20] sm:$0xff]
    %v339 = vld [vmem:[%s333 + $0x28] sm:$0xff]
    %v340 = vld [vmem:[%s333 + $0x30] sm:$0xff]
    %v341 = vld [vmem:[%s333 + $0x38] sm:$0xff]
    %342 = vmatpush.msra.mxu0 0.0
    %343 = vmatpush.msra.mxu0 0.0
    %344 = vmatpush.msra.mxu0 0.0
    %345 = vmatpush.msra.mxu0 0.0
    %346 = vmatpush.msra.mxu0 0.0
    %347 = vmatpush.msra.mxu0 0.0
    %348 = vmatpush.msra.mxu0 0.0
    %349 = vmatpush.msra.mxu0 0.0
    %350 = vmatpush.msra.mxu0 0.0
    %351 = vmatpush.msra.mxu0 0.0
    %352 = vmatpush.msra.mxu0 0.0
    %353 = vmatpush.msra.mxu0 0.0
    %354 = vmatpush.msra.mxu0 %v341
    %355 = vmatpush.msra.mxu0 %v340
    %356 = vmatpush.msra.mxu0 %v339
    %357 = vmatpush.msra.mxu0 %v338
    %358 = vmatmul.f32.gmra.mxu0 %v47
    %v359 = vpop.f32.mrf.mxu0
    %v360 = vadd.f32 0.0, %v359
    %361 = vdwg.mxu0
    %362 = vmatpush.msra.mxu0 0.0
    %363 = vmatpush.msra.mxu0 0.0
    %364 = vmatpush.msra.mxu0 0.0
    %365 = vmatpush.msra.mxu0 0.0
    %366 = vmatpush.msra.mxu0 0.0
    %367 = vmatpush.msra.mxu0 0.0
    %368 = vmatpush.msra.mxu0 0.0
    %369 = vmatpush.msra.mxu0 0.0
    %370 = vmatpush.msra.mxu0 0.0
    %371 = vmatpush.msra.mxu0 0.0
    %372 = vmatpush.msra.mxu0 0.0
    %373 = vmatpush.msra.mxu0 0.0
    %374 = vmatpush.msra.mxu0 %v337
    %375 = vmatpush.msra.mxu0 %v336
    %376 = vmatpush.msra.mxu0 %v335
    %377 = vmatpush.msra.mxu0 %v334
    %378 = vmatmul.f32.gmra.mxu0 %v304
    %v379 = vpop.f32.mrf.mxu0
    %v380 = vadd.f32 %v360, %v379
    %381 = vdwg.mxu0
    %v382 = vld [vmem:[%s8 + $0x3] sm:$0x1]
    %v383 = vperm.slane %v382, 0
    %v384 = vadd.f32 %v380, %v383
    %v385 = vmul.f32 %v384, 0.5
    %v386 = vtanh.pop %v385
    %v387 = vadd.f32 %v386, 1.0
    %v388 = vmul.f32 %v387, 0.5
    %s389 = scalar_lea.vmem %s6, 128
    %v390 = vld [vmem:[%s389] sm:$0xff]
    %v391 = vld [vmem:[%s389 + $0x8] sm:$0xff]
    %v392 = vld [vmem:[%s389 + $0x10] sm:$0xff]
    %v393 = vld [vmem:[%s389 + $0x18] sm:$0xff]
    %v394 = vld [vmem:[%s389 + $0x20] sm:$0xff]
    %v395 = vld [vmem:[%s389 + $0x28] sm:$0xff]
    %v396 = vld [vmem:[%s389 + $0x30] sm:$0xff]
    %v397 = vld [vmem:[%s389 + $0x38] sm:$0xff]
    %398 = vmatpush.msra.mxu0 0.0
    %399 = vmatpush.msra.mxu0 0.0
    %400 = vmatpush.msra.mxu0 0.0
    %401 = vmatpush.msra.mxu0 0.0
    %402 = vmatpush.msra.mxu0 0.0
    %403 = vmatpush.msra.mxu0 0.0
    %404 = vmatpush.msra.mxu0 0.0
    %405 = vmatpush.msra.mxu0 0.0
    %406 = vmatpush.msra.mxu0 0.0
    %407 = vmatpush.msra.mxu0 0.0
    %408 = vmatpush.msra.mxu0 0.0
    %409 = vmatpush.msra.mxu0 0.0
    %410 = vmatpush.msra.mxu0 %v397
    %411 = vmatpush.msra.mxu0 %v396
    %412 = vmatpush.msra.mxu0 %v395
    %413 = vmatpush.msra.mxu0 %v394
    %414 = vmatmul.f32.gmra.mxu0 %v47
    %v415 = vpop.f32.mrf.mxu0
    %v416 = vadd.f32 0.0, %v415
    %417 = vdwg.mxu0
    %418 = vmatpush.msra.mxu0 0.0
    %419 = vmatpush.msra.mxu0 0.0
    %420 = vmatpush.msra.mxu0 0.0
    %421 = vmatpush.msra.mxu0 0.0
    %422 = vmatpush.msra.mxu0 0.0
    %423 = vmatpush.msra.mxu0 0.0
    %424 = vmatpush.msra.mxu0 0.0
    %425 = vmatpush.msra.mxu0 0.0
    %426 = vmatpush.msra.mxu0 0.0
    %427 = vmatpush.msra.mxu0 0.0
    %428 = vmatpush.msra.mxu0 0.0
    %429 = vmatpush.msra.mxu0 0.0
    %430 = vmatpush.msra.mxu0 %v393
    %431 = vmatpush.msra.mxu0 %v392
    %432 = vmatpush.msra.mxu0 %v391
    %433 = vmatpush.msra.mxu0 %v390
    %434 = vmatmul.f32.gmra.mxu0 %v304
    %v435 = vpop.f32.mrf.mxu0
    %v436 = vadd.f32 %v416, %v435
    %437 = vdwg.mxu0
    %v438 = vld [vmem:[%s8 + $0x4] sm:$0x1]
    %v439 = vperm.slane %v438, 0
    %v440 = vadd.f32 %v436, %v439
    %v441 = vtanh.pop %v440
    %s442 = scalar_lea.vmem %s6, 192
    %v443 = vld [vmem:[%s442] sm:$0xff]
    %v444 = vld [vmem:[%s442 + $0x8] sm:$0xff]
    %v445 = vld [vmem:[%s442 + $0x10] sm:$0xff]
    %v446 = vld [vmem:[%s442 + $0x18] sm:$0xff]
    %v447 = vld [vmem:[%s442 + $0x20] sm:$0xff]
    %v448 = vld [vmem:[%s442 + $0x28] sm:$0xff]
    %v449 = vld [vmem:[%s442 + $0x30] sm:$0xff]
    %v450 = vld [vmem:[%s442 + $0x38] sm:$0xff]
    %451 = vmatpush.msra.mxu0 0.0
    %452 = vmatpush.msra.mxu0 0.0
    %453 = vmatpush.msra.mxu0 0.0
    %454 = vmatpush.msra.mxu0 0.0
    %455 = vmatpush.msra.mxu0 0.0
    %456 = vmatpush.msra.mxu0 0.0
    %457 = vmatpush.msra.mxu0 0.0
    %458 = vmatpush.msra.mxu0 0.0
    %459 = vmatpush.msra.mxu0 0.0
    %460 = vmatpush.msra.mxu0 0.0
    %461 = vmatpush.msra.mxu0 0.0
    %462 = vmatpush.msra.mxu0 0.0
    %463 = vmatpush.msra.mxu0 %v450
    %464 = vmatpush.msra.mxu0 %v449
    %465 = vmatpush.msra.mxu0 %v448
    %466 = vmatpush.msra.mxu0 %v447
    %467 = vmatmul.f32.gmra.mxu0 %v47
    %v468 = vpop.f32.mrf.mxu0
    %v469 = vadd.f32 0.0, %v468
    %470 = vdwg.mxu0
    %471 = vmatpush.msra.mxu0 0.0
    %472 = vmatpush.msra.mxu0 0.0
    %473 = vmatpush.msra.mxu0 0.0
    %474 = vmatpush.msra.mxu0 0.0
    %475 = vmatpush.msra.mxu0 0.0
    %476 = vmatpush.msra.mxu0 0.0
    %477 = vmatpush.msra.mxu0 0.0
    %478 = vmatpush.msra.mxu0 0.0
    %479 = vmatpush.msra.mxu0 0.0
    %480 = vmatpush.msra.mxu0 0.0
    %481 = vmatpush.msra.mxu0 0.0
    %482 = vmatpush.msra.mxu0 0.0
    %483 = vmatpush.msra.mxu0 %v446
    %484 = vmatpush.msra.mxu0 %v445
    %485 = vmatpush.msra.mxu0 %v444
    %486 = vmatpush.msra.mxu0 %v443
    %487 = vmatmul.f32.gmra.mxu0 %v304
    %v488 = vpop.f32.mrf.mxu0
    %v489 = vadd.f32 %v469, %v488
    %490 = vdwg.mxu0
    %v491 = vld [vmem:[%s8 + $0x5] sm:$0x1]
    %v492 = vperm.slane %v491, 0
    %v493 = vadd.f32 %v489, %v492
    %v494 = vmul.f32 %v493, 0.5
    %v495 = vtanh.pop %v494
    %v496 = vadd.f32 %v495, 1.0
    %v497 = vmul.f32 %v496, 0.5
    %v498 = vmul.f32 %v388, %v36
    %v499 = vmul.f32 %v332, %v441
    %v500 = vadd.f32 %v498, %v499
    %v501 = vtanh.pop %v500
    %v502 = vmul.f32 %v497, %v501
    %v503 = vld [vmem:[%s7] sm:$0xff]
    %v504 = vld [vmem:[%s7 + $0x8] sm:$0xff]
    %v505 = vld [vmem:[%s7 + $0x10] sm:$0xff]
    %v506 = vld [vmem:[%s7 + $0x18] sm:$0xff]
    %v507 = vld [vmem:[%s8 + $0x1] sm:$0x1]
    %v508 = vperm.slane %v507, 0
    %v510 = vsel %vm45, %v502, 0
    %512 = vmatpush.msra.mxu0 0.0
    %513 = vmatpush.msra.mxu0 0.0
    %514 = vmatpush.msra.mxu0 0.0
    %515 = vmatpush.msra.mxu0 0.0
    %516 = vmatpush.msra.mxu0 0.0
    %517 = vmatpush.msra.mxu0 0.0
    %518 = vmatpush.msra.mxu0 0.0
    %519 = vmatpush.msra.mxu0 0.0
    %520 = vmatpush.msra.mxu0 0.0
    %521 = vmatpush.msra.mxu0 0.0
    %522 = vmatpush.msra.mxu0 0.0
    %523 = vmatpush.msra.mxu0 0.0
    %524 = vmatpush.msra.mxu0 %v506
    %525 = vmatpush.msra.mxu0 %v505
    %526 = vmatpush.msra.mxu0 %v504
    %527 = vmatpush.msra.mxu0 %v503
    %528 = vmatmul.f32.gmra.mxu0 %v510
    %v529 = vpop.f32.mrf.mxu0
    %v530 = vadd.f32 %v508, %v529
    %531 = vdwg.mxu0
    %vm532 = vcmask 519168
    %v533 = vsel %vm532, %v530, -inf
    %534 = vmax.xlane.f32.xlu0 %v533
    %v535 = vpop.xlane.xlu0 %534
    %v536 = vsub.f32 %v530, %v535
    %v537 = vmul.f32 %v536, 1.442695
    %v538 = vpow.pop %v537
    %v539 = vsel %vm532, %v538, 0.0
    %540 = vadd.xlane.f32.xlu0 %v539
    %v541 = vpop.xlane.xlu0 %540
    %v542 = vlog2.pop %v541
    %v543 = vmul.f32 %v542, 0.6931472
    %v544 = vadd.f32 %v543, %v535
    %v545 = vsub.f32 %v530, %v544
    %546 = vst [vmem:[#allocation2] sm:$0xff] 0.0
    %547 = vst.msk [vmem:[#allocation2] sm:$0xf] %vm532, %v545
    %548 = vrot.lane.b32.xlu0 %v502, 64
    %v549 = vpop.permute.xlu0 %548
    %vm551 = vcmask 781824
    %552 = vst.msk [vmem:[#allocation2] sm:$0xf] %vm551, %v549
    %554 = vrot.lane.b32.xlu0 %v500, 96
    %v555 = vpop.permute.xlu0 %554
    %vm557 = vcmask 1044224
    %558 = vst.msk [vmem:[#allocation2] sm:$0xf] %vm557, %v555
    %559 = vst.msk [vmem:[#allocation2 + $0x4] sm:$0xf] %vm94, %v105
    // Predicated region
    $region38: #{tpu_custom_call.1} parent=1 // pred_check
      _
    $region39: #{tpu_custom_call.1} parent=1 // pred_check_branch
      %561 = sbr.rel (0) target = $region41
    $region40: #{tpu_custom_call.1} parent=1 // pred_region
      %563 = vsyncadd [#allocation3], 0
      %s565 = sshll.u32 [#allocation2], 4
      %s566 = int_to_ptr.vmem [resolvable:$true] %s565
      %s567 = sshll.u32 %s9, 4
      %s568 = int_to_ptr.hbm [resolvable:$true] %s567
      %570 = dma.vmem_to_hbm [thread:$0]  %s566, 128, %s568, [#allocation3]
    $region41: #{tpu_custom_call.1} parent=1 // pred_fallthru
      _
    // Predicated region
    $region42: #{tpu_custom_call.1} parent=1 // pred_check
      _
    $region43: #{tpu_custom_call.1} parent=1 // pred_check_branch
      %572 = sbr.rel (0) target = $region45
    $region44: #{tpu_custom_call.1} parent=1 // pred_region
      %574 = dma.done [#allocation3], 128
    $region45: #{tpu_custom_call.1} parent=1 // pred_fallthru
      _
    %575 = vsyncpa [#allocation3], 1

</llo_original>
